<compile_context>
chip_gen: v6e
topology: v6e:2x2x1
jax: 0.10.0
libtpu: 0.0.40
codegen_flags: <defaults>
</compile_context>

<pallas_src>
import jax
import jax.numpy as jnp
from jax.experimental import pallas as pl
from jax.experimental.pallas import tpu as pltpu


def linear_clamp_kernel(x_ref, wb_ref, o_ref):
    # x_ref:  (N, IN)
    # wb_ref: (IN + 1, OUT)   rows 0..IN-1 = W^T, row IN = bias
    # o_ref:  (N, OUT)
    in_f = x_ref.shape[1]
    w_t = wb_ref[:in_f, :]            # (IN, OUT)  static slice -> no data movement
    b = wb_ref[in_f:in_f + 1, :]      # (1, OUT)   broadcast bias row
    v1 = jnp.dot(x_ref[...], w_t, preferred_element_type=jnp.float32) + b
    o_ref[...] = jnp.maximum(v1, 1.0).astype(o_ref.dtype)  # clamp in f32, cast once


def pack_params(w, b):
    """One-time (parameter-creation time) packing: W is PyTorch-style (out, in).

    Returns a single (in + 1, out) operand holding W^T with the bias as the last row,
    so the per-call path has no transpose/reshape ops and only 2 input DMAs.
    """
    out_f, in_f = w.shape
    return jnp.concatenate([w.T, b.reshape(1, out_f)], axis=0)  # (in_f + 1, out_f)


def linear_clamp(x, wb_packed):
    # x: (n, in_f); wb_packed: (in_f + 1, out_f). Handles any n in a single call —
    # callers with many rows should batch them here instead of looping (launch cost
    # dominates the ~128 FLOPs per row by >100x).
    n, in_f = x.shape
    out_f = wb_packed.shape[1]
    assert wb_packed.shape[0] == in_f + 1
    return pl.pallas_call(
        linear_clamp_kernel,
        out_shape=jax.ShapeDtypeStruct((n, out_f), x.dtype),
        in_specs=[
            pl.BlockSpec(memory_space=pltpu.MemorySpace.VMEM),
            pl.BlockSpec(memory_space=pltpu.MemorySpace.VMEM),
        ],
        out_specs=pl.BlockSpec(memory_space=pltpu.MemorySpace.VMEM),
    )(x, wb_packed)


if __name__ == "__main__":
    key = jax.random.PRNGKey(0)
    kx, kw, kb = jax.random.split(key, 3)

    # Module shapes: Linear(8, 8); input x of shape (1, 8)
    x = jax.random.normal(kx, (1, 8), dtype=jnp.float32)
    # PyTorch-like uniform(-1/sqrt(8), 1/sqrt(8)) parameter init
    bound = 1.0 / jnp.sqrt(8.0)
    w = jax.random.uniform(kw, (8, 8), dtype=jnp.float32, minval=-bound, maxval=bound)
    b = jax.random.uniform(kb, (8,), dtype=jnp.float32, minval=-bound, maxval=bound)

    # Pack parameters once (amortized across all subsequent calls).
    wb = pack_params(w, b)
    wb = jax.block_until_ready(wb)

    out = linear_clamp(x, wb)
    out = jax.block_until_ready(out)

    # Reference check in plain JAX
    ref = jnp.maximum(x @ w.T + b, 1.0)
    assert jnp.allclose(out, ref, atol=1e-5, rtol=1e-5), (out, ref)

    print("KERNEL_OK")
</pallas_src>

<mosaic_0001>
module attributes {stable_mosaic.version = 11 : i64} {
  func.func @linear_clamp_kernel(%arg0: memref<1x8xf32, #tpu.memory_space<vmem>>, %arg1: memref<9x8xf32, #tpu.memory_space<vmem>>, %arg2: memref<1x8xf32, #tpu.memory_space<vmem>>) attributes {dimension_semantics = [], scalar_prefetch = 0 : i64, scratch_operands = 0 : i64, tpu.core_type = #tpu.core_type<tc>} {
    %c0 = arith.constant 0 : index
    %c0_0 = arith.constant 0 : index
    %0 = vector.load %arg1[%c0, %c0_0] : memref<9x8xf32, #tpu.memory_space<vmem>>, vector<8x8xf32>
    %c8 = arith.constant 8 : index
    %c0_1 = arith.constant 0 : index
    %1 = vector.load %arg1[%c8, %c0_1] : memref<9x8xf32, #tpu.memory_space<vmem>>, vector<1x8xf32>
    %c0_2 = arith.constant 0 : index
    %c0_3 = arith.constant 0 : index
    %2 = vector.load %arg0[%c0_2, %c0_3] : memref<1x8xf32, #tpu.memory_space<vmem>>, vector<1x8xf32>
    %cst = arith.constant dense<0.000000e+00> : vector<1x8xf32>
    %3 = tpu.matmul %2, %0, %cst {dimension_numbers = #tpu.dot_dimension_numbers<[1], [0], [0], [1], [0, 0, 1, 1], [], []>} : vector<1x8xf32>, vector<8x8xf32>, vector<1x8xf32> -> vector<1x8xf32>
    %4 = arith.addf %3, %1 : vector<1x8xf32>
    %cst_4 = arith.constant 1.000000e+00 : f32
    %5 = vector.broadcast %cst_4 : f32 to vector<1x8xf32>
    %6 = arith.maximumf %4, %5 : vector<1x8xf32>
    %c0_5 = arith.constant 0 : index
    %c0_6 = arith.constant 0 : index
    %7 = vector.load %arg2[%c0_5, %c0_6] : memref<1x8xf32, #tpu.memory_space<vmem>>, vector<1x8xf32>
    tpu.vector_store %arg2[%c0_5, %c0_6], %6 {strides = array<i32>} : memref<1x8xf32, #tpu.memory_space<vmem>>, vector<1x8xf32>,
    return
  }
}

</mosaic_0001>

<llo_original>
// kernel: tpu_custom_call.1
$region0: #{tpu_custom_call.1}
  #allocation0 [shape = 'u32[]', space=smem, size = 0x4, offset = 0x4, fixed_abs, tag = 'smem constant byte address 0x4 - core index']
  #allocation1 [shape = 'u32[144,128]{1,0:T(1,128)}', space=vmem, size = 0x12000, scoped, tag = 'internal scratch']
  %s0 = inlined_call_operand.vmem [shape: f32[1,8], index: 0, kind: input, shape index: {}]
  %s1 = inlined_call_operand.vmem [shape: f32[9,8], index: 1, kind: input, shape index: {}]
  %s2 = inlined_call_operand.hbm [shape: f32[1,8], index: 2, kind: output, shape index: {}]
  %s3 = sld [smem:[#allocation0]]
  $region18: #{tpu_custom_call.1} parent=0
    _
  %s5 = ssub.s32 1, %s3
  %s6 = scalar_select 0, %s5, %s3
  $region1: #{tpu_custom_call.1} parent=0
    #allocation2 [shape = 'u8[512]{0}', space=vmem, size = 0x400, scoped, tag = 'output window, operand 0, single buffered']
    #allocation3 [shape = 's32[1]{0}', space=sflag, size = 0x4, scoped, tag = 'scoped memory for tpu_custom_call.1']
    %7 = vsyncpa [#allocation3], 0
    // Predicated region
    $region2: #{tpu_custom_call.1} parent=1 // pred_check
      _
    $region3: #{tpu_custom_call.1} parent=1 // pred_check_branch
      %9 = sbr.rel (0) target = $region5
    $region4: #{tpu_custom_call.1} parent=1 // pred_region
      _
    $region5: #{tpu_custom_call.1} parent=1 // pred_fallthru
      _
    // Predicated region
    $region6: #{tpu_custom_call.1} parent=1 // pred_check
      _
    $region7: #{tpu_custom_call.1} parent=1 // pred_check_branch
      %11 = sbr.rel (0) target = $region9
    $region8: #{tpu_custom_call.1} parent=1 // pred_region
      _
    $region9: #{tpu_custom_call.1} parent=1 // pred_fallthru
      _
    %v12 = vld [vmem:[%s1] sm:$0xff]
    %v13 = vld [vmem:[%s1 + $0x8] sm:$0x1]
    %v14 = vld [vmem:[%s0] sm:$0x1]
    %vm15 = vcmask 64512
    %v17 = vsel %vm15, %v14, 0
    %19 = vmatprep.subr.mxu0 0.0
    %20 = vmatpush1.msra.mxu0 0.0
    %21 = vmatprep.subr.mxu0 0.0
    %22 = vmatpush1.msra.mxu0 0.0
    %23 = vmatprep.subr.mxu0 0.0
    %24 = vmatpush1.msra.mxu0 0.0
    %25 = vmatprep.subr.mxu0 0.0
    %26 = vmatpush1.msra.mxu0 0.0
    %27 = vmatprep.subr.mxu0 0.0
    %28 = vmatpush1.msra.mxu0 0.0
    %29 = vmatprep.subr.mxu0 0.0
    %30 = vmatpush1.msra.mxu0 0.0
    %31 = vmatprep.subr.mxu0 0.0
    %32 = vmatpush1.msra.mxu0 0.0
    %33 = vmatprep.subr.mxu0 0.0
    %34 = vmatpush1.msra.mxu0 0.0
    %35 = vmatprep.subr.mxu0 0.0
    %36 = vmatpush1.msra.mxu0 0.0
    %37 = vmatprep.subr.mxu0 0.0
    %38 = vmatpush1.msra.mxu0 0.0
    %39 = vmatprep.subr.mxu0 0.0
    %40 = vmatpush1.msra.mxu0 0.0
    %41 = vmatprep.subr.mxu0 0.0
    %42 = vmatpush1.msra.mxu0 0.0
    %43 = vmatprep.subr.mxu0 0.0
    %44 = vmatpush1.msra.mxu0 0.0
    %45 = vmatprep.subr.mxu0 0.0
    %46 = vmatpush1.msra.mxu0 0.0
    %47 = vmatprep.subr.mxu0 0.0
    %48 = vmatpush1.msra.mxu0 0.0
    %49 = vmatprep.subr.mxu0 0.0
    %50 = vmatpush1.msra.mxu0 %v12
    %51 = vmatprep.subr.mxu0 0.0
    %52 = vmatpush2.msra.mxu0 0.0
    %53 = vmatprep.subr.mxu0 0.0
    %54 = vmatpush2.msra.mxu0 0.0
    %55 = vmatprep.subr.mxu0 0.0
    %56 = vmatpush2.msra.mxu0 0.0
    %57 = vmatprep.subr.mxu0 0.0
    %58 = vmatpush2.msra.mxu0 0.0
    %59 = vmatprep.subr.mxu0 0.0
    %60 = vmatpush2.msra.mxu0 0.0
    %61 = vmatprep.subr.mxu0 0.0
    %62 = vmatpush2.msra.mxu0 0.0
    %63 = vmatprep.subr.mxu0 0.0
    %64 = vmatpush2.msra.mxu0 0.0
    %65 = vmatprep.subr.mxu0 0.0
    %66 = vmatpush2.msra.mxu0 0.0
    %67 = vmatprep.subr.mxu0 0.0
    %68 = vmatpush2.msra.mxu0 0.0
    %69 = vmatprep.subr.mxu0 0.0
    %70 = vmatpush2.msra.mxu0 0.0
    %71 = vmatprep.subr.mxu0 0.0
    %72 = vmatpush2.msra.mxu0 0.0
    %73 = vmatprep.subr.mxu0 0.0
    %74 = vmatpush2.msra.mxu0 0.0
    %75 = vmatprep.subr.mxu0 0.0
    %76 = vmatpush2.msra.mxu0 0.0
    %77 = vmatprep.subr.mxu0 0.0
    %78 = vmatpush2.msra.mxu0 0.0
    %79 = vmatprep.subr.mxu0 0.0
    %80 = vmatpush2.msra.mxu0 0.0
    %81 = vmatprep.subr.mxu0 0.0
    %82 = vmatpush2.msra.mxu0 0.0
    %83 = vmatprep.mubr.f32.mxu0 0.0
    %84 = vmatmul.mubr.f32.gmra.mxu0 %v17
    %v85 = vpop.f32.mrf.mxu0
    %v86 = vadd.f32 %v13, %v85
    %v87 = vpop.f32.mrf.mxu0
    %88 = vdwg.mxu0
    %v89 = vmax.f32 %v86, 1.0
    %vm90 = vcmask 57344
    %91 = vst.msk [vmem:[#allocation2] sm:$0x1] %vm90, %v89
    // Predicated region
    $region10: #{tpu_custom_call.1} parent=1 // pred_check
      _
    $region11: #{tpu_custom_call.1} parent=1 // pred_check_branch
      %93 = sbr.rel (0) target = $region13
    $region12: #{tpu_custom_call.1} parent=1 // pred_region
      %s95 = ssub.s32 16, 16
      %96 = vsyncadd [#allocation3], %s95
      %s98 = sshll.u32 [#allocation2], 4
      %s99 = int_to_ptr.vmem [resolvable:$true] %s98
      %101 = dma.vmem_to_hbm [thread:$0]  %s99, 16, %s2, [#allocation3]
    $region13: #{tpu_custom_call.1} parent=1 // pred_fallthru
      _
    // Predicated region
    $region14: #{tpu_custom_call.1} parent=1 // pred_check
      _
    $region15: #{tpu_custom_call.1} parent=1 // pred_check_branch
      %103 = sbr.rel (0) target = $region17
    $region16: #{tpu_custom_call.1} parent=1 // pred_region
      %104 = dma.done [#allocation3], 16
    $region17: #{tpu_custom_call.1} parent=1 // pred_fallthru
      _
    %105 = vsyncpa [#allocation3], 1

</llo_original>
